<compile_context>
chip_gen: v7x
topology: tpu7x:2x2x1
jax: 0.10.0
libtpu: 0.0.40
codegen_flags: <defaults>
</compile_context>

<pallas_src>
import jax
import jax.numpy as jnp
from jax import lax
from jax.experimental import pallas as pl
from jax.experimental.pallas import tpu as pltpu

_LANES = 128
_MAX_BLOCK_ROWS = 2048  # 2048 x 128 x 4B = 1 MiB per f32 block


def _make_envelope_kernel(exponent: float, out_dtype):
    # Coefficients are static (fixed at module construction) -> baked in.
    p = float(exponent) + 1.0
    a = -(p + 1.0) * (p + 2.0) / 2.0
    b = p * (p + 2.0)
    c = -p * (p + 1.0) / 2.0
    p_is_integral = p.is_integer() and p >= 1.0
    p_int = int(p)

    def kernel(x_ref, o_ref):
        # Compute in f32 (no-op for f32 inputs; avoids bf16 EUP issues on v5e).
        x = x_ref[...].astype(jnp.float32)
        if p_is_integral:
            # Integer powers -> chained VPU multiplies, no exp/log transcendentals.
            xpm1 = lax.integer_pow(x, p_int - 1)
        else:
            xpm1 = x ** (p - 1.0)
        xp = xpm1 * x
        xpp1 = xp * x
        # Exact divide (pl.reciprocal(approx=True) would break 1e-5 tolerance).
        env_val = 1.0 / x + a * xpm1 + b * xp + c * xpp1
        out = jnp.where(x < 1.0, env_val, jnp.zeros_like(x))
        o_ref[...] = out.astype(out_dtype)

    return kernel


def _round_up(v: int, m: int) -> int:
    return ((v + m - 1) // m) * m


def envelope(x: jax.Array, *, exponent: float,
             max_block_rows: int = _MAX_BLOCK_ROWS) -> jax.Array:
    """Apply the Envelope function elementwise to x (any shape)."""
    orig_shape = x.shape
    orig_dtype = x.dtype
    n = x.size
    if n == 0:
        return x

    # Sublane packing multiple per dtype: 8 (f32), 16 (bf16/f16), 32 (int8/fp8).
    itemsize = jnp.dtype(orig_dtype).itemsize
    sublane = max(8, 32 // max(1, itemsize))

    x_flat = jnp.reshape(x, (-1,))
    # Minimal lane-alignment pad (only when n % 128 != 0; < 128 extra elems).
    # Pad value 2.0 (>= 1) maps to 0 and never divides by zero.
    lane_pad = (-n) % _LANES
    if lane_pad:
        x_flat = jnp.concatenate(
            [x_flat, jnp.full((lane_pad,), 2.0, dtype=orig_dtype)])
    rows = x_flat.size // _LANES
    x2d = jnp.reshape(x_flat, (rows, _LANES))

    # Large blocks (up to ~1 MiB f32), but keep >= 2 grid steps when the data
    # allows so both v7x TensorCores get work.  Ragged row tail is handled by
    # Pallas partial-block masking via the cdiv grid (no tile-sized padding).
    block_rows = min(max_block_rows, _round_up(pl.cdiv(rows, 2), sublane))
    block_rows = max(block_rows, sublane)
    grid = (pl.cdiv(rows, block_rows),)

    out2d = pl.pallas_call(
        _make_envelope_kernel(exponent, orig_dtype),
        out_shape=jax.ShapeDtypeStruct((rows, _LANES), orig_dtype),
        grid_spec=pltpu.PrefetchScalarGridSpec(
            num_scalar_prefetch=0,
            grid=grid,
            in_specs=[pl.BlockSpec((block_rows, _LANES), lambda i: (i, 0))],
            out_specs=pl.BlockSpec((block_rows, _LANES), lambda i: (i, 0)),
        ),
        compiler_params=pltpu.CompilerParams(
            dimension_semantics=("parallel",),
        ),
    )(x2d)

    out_flat = jnp.reshape(out2d, (-1,))
    if lane_pad:
        out_flat = out_flat[:n]
    return jnp.reshape(out_flat, orig_shape)


def envelope_ref(x: jax.Array, *, exponent: float) -> jax.Array:
    """Pure-JAX reference mirroring the PyTorch forward."""
    p = exponent + 1.0
    a = -(p + 1.0) * (p + 2.0) / 2.0
    b = p * (p + 2.0)
    c = -p * (p + 1.0) / 2.0
    env_val = 1.0 / x + a * x ** (p - 1.0) + b * x ** p + c * x ** (p + 1.0)
    return jnp.where(x < 1.0, env_val, jnp.zeros_like(x))


if __name__ == "__main__":
    key = jax.random.PRNGKey(0)
    # NCHW-like input: batch=2, channels=4, spatial=16x16
    # values in (0, 2) so both branches of the where() are exercised.
    x = jax.random.uniform(
        key, (2, 4, 16, 16), dtype=jnp.float32, minval=0.05, maxval=2.0
    )

    exponent = 5.0  # Envelope(exponent=5.0); p = 6

    out = envelope(x, exponent=exponent)
    out = jax.block_until_ready(out)

    ref = envelope_ref(x, exponent=exponent)
    assert out.shape == x.shape and out.dtype == x.dtype
    assert jnp.allclose(out, ref, rtol=1e-5, atol=1e-5), "mismatch vs reference"

    print("KERNEL_OK")
</pallas_src>

<mosaic_0001>
module attributes {stable_mosaic.version = 11 : i64} {
  func.func @kernel(%arg0: i32, %arg1: memref<8x128xf32, #tpu.memory_space<vmem>>, %arg2: memref<8x128xf32, #tpu.memory_space<vmem>>) attributes {dimension_semantics = [#tpu.dimension_semantics<parallel>], iteration_bounds = array<i64: 2>, scalar_prefetch = 0 : i64, scratch_operands = 0 : i64, tpu.core_type = #tpu.core_type<tc>, window_params = [{transform_indices = @transform_0, window_bounds = array<i64: 8, 128>}, {transform_indices = @transform_1, window_bounds = array<i64: 8, 128>}]} {
    %c0 = arith.constant 0 : index
    %c0_0 = arith.constant 0 : index
    %0 = vector.load %arg1[%c0, %c0_0] : memref<8x128xf32, #tpu.memory_space<vmem>>, vector<8x128xf32>
    %1 = arith.mulf %0, %0 : vector<8x128xf32>
    %2 = arith.mulf %1, %1 : vector<8x128xf32>
    %3 = arith.mulf %0, %2 : vector<8x128xf32>
    %4 = arith.mulf %3, %0 : vector<8x128xf32>
    %5 = arith.mulf %4, %0 : vector<8x128xf32>
    %cst = arith.constant 1.000000e+00 : f32
    %6 = vector.broadcast %cst : f32 to vector<8x128xf32>
    %7 = arith.divf %6, %0 : vector<8x128xf32>
    %cst_1 = arith.constant -2.800000e+01 : f32
    %8 = vector.broadcast %cst_1 : f32 to vector<8x128xf32>
    %9 = arith.mulf %8, %3 : vector<8x128xf32>
    %10 = arith.addf %7, %9 : vector<8x128xf32>
    %cst_2 = arith.constant 4.800000e+01 : f32
    %11 = vector.broadcast %cst_2 : f32 to vector<8x128xf32>
    %12 = arith.mulf %11, %4 : vector<8x128xf32>
    %13 = arith.addf %10, %12 : vector<8x128xf32>
    %cst_3 = arith.constant -2.100000e+01 : f32
    %14 = vector.broadcast %cst_3 : f32 to vector<8x128xf32>
    %15 = arith.mulf %14, %5 : vector<8x128xf32>
    %16 = arith.addf %13, %15 : vector<8x128xf32>
    %cst_4 = arith.constant 1.000000e+00 : f32
    %17 = vector.broadcast %cst_4 : f32 to vector<8x128xf32>
    %18 = arith.cmpf olt, %0, %17 : vector<8x128xf32>
    %cst_5 = arith.constant 0.000000e+00 : f32
    %19 = vector.broadcast %cst_5 : f32 to vector<8x128xf32>
    %20 = arith.select %18, %16, %19 : vector<8x128xi1>, vector<8x128xf32>
    %c0_6 = arith.constant 0 : index
    %c0_7 = arith.constant 0 : index
    %21 = vector.load %arg2[%c0_6, %c0_7] : memref<8x128xf32, #tpu.memory_space<vmem>>, vector<8x128xf32>
    tpu.vector_store %arg2[%c0_6, %c0_7], %20 {strides = array<i32>} : memref<8x128xf32, #tpu.memory_space<vmem>>, vector<8x128xf32>,
    return
  }
  func.func @transform_0(%arg0: i32) -> (i32, i32) {
    %c0_i32 = arith.constant 0 : i32
    %c0_i32_0 = arith.constant 0 : i32
    return %arg0, %c0_i32 : i32, i32
  }
  func.func @transform_1(%arg0: i32) -> (i32, i32) {
    %c0_i32 = arith.constant 0 : i32
    %c0_i32_0 = arith.constant 0 : i32
    return %arg0, %c0_i32 : i32, i32
  }
}

</mosaic_0001>

<llo_original>
// kernel: tpu_custom_call.1
$region0: #{tpu_custom_call.1}
  #allocation0 [shape = 'u32[]', space=smem, size = 0x4, offset = 0x4, fixed_abs, tag = 'smem constant byte address 0x4 - core index']
  #allocation1 [shape = 'u32[144,128]{1,0:T(1,128)}', space=vmem, size = 0x12000, scoped, tag = 'internal scratch']
  %s0 = inlined_call_operand.hbm [shape: f32[16,128], index: 0, kind: input, shape index: {}]
  %s1 = inlined_call_operand.hbm [shape: f32[16,128], index: 1, kind: output, shape index: {}]
  %s2 = sld [smem:[#allocation0]]
  $region41: #{tpu_custom_call.1} parent=0
    _
  %s4 = ssub.s32 1, %s2
  %s5 = scalar_select 0, %s4, %s2
  $region1: #{tpu_custom_call.1} parent=0
    #allocation2 [shape = 'u8[8192]{0}', space=vmem, size = 0x2000, scoped, tag = 'input window, operand 0']
    #allocation3 [shape = 's32[2]{0}', space=sflag, size = 0x8, scoped, tag = 'scoped memory for tpu_custom_call.1']
    #allocation4 [shape = 's32[2]{0}', space=sflag, size = 0x8, scoped, tag = 'scoped memory for tpu_custom_call.1']
    #allocation5 [shape = 'u8[8192]{0}', space=vmem, size = 0x2000, scoped, tag = 'output window, operand 0']
    %6 = vsyncpa [#allocation3], 0
    %s7 = scalar_lea.sflag [#allocation3], 1
    %8 = vsyncpa %s7, 0
    %9 = vsyncpa [#allocation4], 0
    %s10 = scalar_lea.sflag [#allocation4], 1
    %11 = vsyncpa %s10, 0
    loop: start=0, step=1, limit=4
    $region2: #{tpu_custom_call.1} parent=1 // loop_pre_header
      _
    $region3: #{tpu_custom_call.1} parent=1 // loop_header
      %s13 = sphi 0, %s17
      %p14 = scmp.ge.s32.totalorder %s13, 4
      %s23 = sphi 0, %s25
      %s26 = sphi 0, %s23
      %s27 = sphi 0, %s26
      %s43 = sphi 0, %s27
      %s49 = sphi 0, %s51
      %s52 = sphi 0, %s49
      %s53 = sphi 0, %s52
      %s69 = sphi 0, %s53
    $region4: #{tpu_custom_call.1} parent=1 // loop_header_branch
      %16 = sbr.rel (%p14) target = $region8
    $region5: #{tpu_custom_call.1} parent=1 // loop_body
      %s18 = ssub.s32 %s13, 1
      %s19 = ssub.s32 %s13, 2
      %s20 = sadd.s32 %s13, 1
      %s21 = ssub.s32 %s13, %s20
      %p22 = scmp.eq.s32.totalorder %s21, 0
      %s24 = sadd.s32 %s23, 1
      %s25 = scalar_select %p22, %s23, %s24
      %p28 = pneg %p22
      %p29 = scmp.eq.s32.totalorder %s13, 1
      %p30 = por %p28, %p29
      %p31 = scmp.ne.s32.totalorder %s23, %s26
      %p32 = scmp.eq.s32.totalorder %s13, 0
      %p33 = por %p31, %p32
      %p34 = scmp.ne.s32.totalorder %s23, %s26
      %p35 = scmp.eq.s32.totalorder %s18, 1
      %p36 = por %p34, %p35
      %p37 = scmp.ne.s32.totalorder %s26, %s27
      %p38 = scmp.eq.s32.totalorder %s18, 0
      %p39 = por %p37, %p38
      %p40 = scmp.ne.s32.totalorder %s26, %s27
      %p41 = scmp.eq.s32.totalorder %s19, 1
      %p42 = por %p40, %p41
      %p44 = scmp.ne.s32.totalorder %s27, %s43
      %p45 = scmp.eq.s32.totalorder %s19, 0
      %p46 = por %p44, %p45
      %s47 = ssub.s32 %s13, %s20
      %p48 = scmp.eq.s32.totalorder %s47, 0
      %s50 = sadd.s32 %s49, 1
      %s51 = scalar_select %p48, %s49, %s50
      %p54 = pneg %p48
      %p55 = scmp.eq.s32.totalorder %s13, 1
      %p56 = por %p54, %p55
      %p57 = scmp.ne.s32.totalorder %s49, %s52
      %p58 = scmp.eq.s32.totalorder %s13, 0
      %p59 = por %p57, %p58
      %p60 = scmp.ne.s32.totalorder %s49, %s52
      %p61 = scmp.eq.s32.totalorder %s18, 1
      %p62 = por %p60, %p61
      %p63 = scmp.ne.s32.totalorder %s52, %s53
      %p64 = scmp.eq.s32.totalorder %s18, 0
      %p65 = por %p63, %p64
      %p66 = scmp.ne.s32.totalorder %s52, %s53
      %p67 = scmp.eq.s32.totalorder %s19, 1
      %p68 = por %p66, %p67
      %p70 = scmp.ne.s32.totalorder %s53, %s69
      %p71 = scmp.eq.s32.totalorder %s19, 0
      %p72 = por %p70, %p71
      %p73 = scmp.le.s32.totalorder 1, %s13
      %p74 = scmp.lt.s32.totalorder %s13, 3
      %p75 = pnand %p73, %p74
      %p76 = pneg %p75
      // Predicated region
      $region9: #{tpu_custom_call.1} parent=5 // pred_check
        _
      $region10: #{tpu_custom_call.1} parent=5 // pred_check_branch
        %78 = sbr.rel (%p75) target = $region12
      $region11: #{tpu_custom_call.1} parent=5 // pred_region
        %s79 = ssub.s32 %s13, 1
      $region12: #{tpu_custom_call.1} parent=5 // pred_fallthru
        _
      %p80 = scmp.lt.s32.totalorder %s13, 2
      // Predicated region
      $region13: #{tpu_custom_call.1} parent=5 // pred_check
        %p81 = pneg %p80
      $region14: #{tpu_custom_call.1} parent=5 // pred_check_branch
        %83 = sbr.rel (%p81) target = $region16
      $region15: #{tpu_custom_call.1} parent=5 // pred_region
        // Predicated region
        $region17: #{tpu_custom_call.1} parent=15 // pred_check
          %p84 = pneg %p33
        $region18: #{tpu_custom_call.1} parent=15 // pred_check_branch
          %86 = sbr.rel (%p84) target = $region20
        $region19: #{tpu_custom_call.1} parent=15 // pred_region
          %s87 = sand.u32 %s23, 1
          %s88 = scalar_lea.sflag [#allocation3], %s87
          %s89 = sand.u32 %s23, 1
          %s90 = smul.addr %s89, 8
          %s91 = scalar_lea.vmem [#allocation2], %s90
          %s93 = ssub.s32 128, 128
          %94 = vsyncadd %s88, %s93
          %s95 = smul.addr %s13, 128
          %s96 = scalar_lea.hbm %s0, %s95
          %s98 = sshll.u32 %s91, 4
          %s99 = int_to_ptr.vmem [resolvable:$true] %s98
          %101 = dma.hbm_to_vmem [thread:$0]  %s96, 128, %s99, %s88
        $region20: #{tpu_custom_call.1} parent=15 // pred_fallthru
          _
      $region16: #{tpu_custom_call.1} parent=5 // pred_fallthru
        _
      %p102 = scmp.le.s32.totalorder 1, %s13
      %p103 = scmp.lt.s32.totalorder %s13, 3
      %p104 = pnand %p102, %p103
      %p105 = pneg %p104
      // Predicated region
      $region21: #{tpu_custom_call.1} parent=5 // pred_check
        _
      $region22: #{tpu_custom_call.1} parent=5 // pred_check_branch
        %107 = sbr.rel (%p104) target = $region24
      $region23: #{tpu_custom_call.1} parent=5 // pred_region
        %s108 = ssub.s32 %s13, 1
        %s109 = sand.u32 %s26, 1
        %s110 = scalar_lea.sflag [#allocation3], %s109
        %s111 = sand.u32 %s26, 1
        %s112 = smul.addr %s111, 8
        %s113 = scalar_lea.vmem [#allocation2], %s112
        // Predicated region
        $region25: #{tpu_custom_call.1} parent=23 // pred_check
          %p114 = pneg %p39
        $region26: #{tpu_custom_call.1} parent=23 // pred_check_branch
          %116 = sbr.rel (%p114) target = $region28
        $region27: #{tpu_custom_call.1} parent=23 // pred_region
          %117 = dma.done %s110, 128
        $region28: #{tpu_custom_call.1} parent=23 // pred_fallthru
          _
        %s118 = sand.u32 %s26, 1
        %s119 = scalar_lea.sflag [#allocation3], %s118
        %s120 = sand.u32 %s26, 1
        %s121 = smul.addr %s120, 8
        %s122 = scalar_lea.vmem [#allocation2], %s121
        %p123 = pneg %p39
        %p124 = pneg %p36
        %p125 = pneg %p65
        %p126 = pneg %p62
        %s127 = sand.u32 %s52, 1
        %s128 = scalar_lea.sflag [#allocation4], %s127
        %s129 = sand.u32 %s52, 1
        %s130 = smul.addr %s129, 8
        %s131 = scalar_lea.vmem [#allocation5], %s130
        %v132 = vld [vmem:[%s113] sm:$0xff]
        %v133 = vmul.f32 %v132, %v132
        %v134 = vmul.f32 %v133, %v133
        %v135 = vmul.f32 %v132, %v134
        %v136 = vmul.f32 %v135, %v132
        %v137 = vmul.f32 %v136, %v132
        %v138 = vrcp.pop %v132
        %v139 = vmul.f32 1.0, %v138
        %v140 = vmul.f32 %v135, -28.0
        %v141 = vadd.f32 %v139, %v140
        %v142 = vmul.f32 %v136, 48.0
        %v143 = vadd.f32 %v141, %v142
        %v144 = vmul.f32 %v137, -21.0
        %v145 = vadd.f32 %v143, %v144
        %vm146 = vcmp.lt.f32.partialorder %v132, 1.0
        %v147 = vsel %vm146, %v145, 0.0
        %148 = vst [vmem:[%s131] sm:$0xff] %v147
        %s149 = sand.u32 %s52, 1
        %s150 = scalar_lea.sflag [#allocation4], %s149
        %s151 = sand.u32 %s52, 1
        %s152 = smul.addr %s151, 8
        %s153 = scalar_lea.vmem [#allocation5], %s152
        // Predicated region
        $region29: #{tpu_custom_call.1} parent=23 // pred_check
          %p154 = pneg %p62
        $region30: #{tpu_custom_call.1} parent=23 // pred_check_branch
          %156 = sbr.rel (%p154) target = $region32
        $region31: #{tpu_custom_call.1} parent=23 // pred_region
          %s158 = ssub.s32 128, 128
          %159 = vsyncadd %s150, %s158
          %s160 = smul.addr %s18, 128
          %s161 = scalar_lea.hbm %s1, %s160
          %s163 = sshll.u32 %s153, 4
          %s164 = int_to_ptr.vmem [resolvable:$true] %s163
          %166 = dma.vmem_to_hbm [thread:$0]  %s164, 128, %s161, %s150
        $region32: #{tpu_custom_call.1} parent=23 // pred_fallthru
          _
      $region24: #{tpu_custom_call.1} parent=5 // pred_fallthru
        _
      %p167 = scmp.le.s32.totalorder 2, %s13
      // Predicated region
      $region33: #{tpu_custom_call.1} parent=5 // pred_check
        %p168 = pneg %p167
      $region34: #{tpu_custom_call.1} parent=5 // pred_check_branch
        %170 = sbr.rel (%p168) target = $region36
      $region35: #{tpu_custom_call.1} parent=5 // pred_region
        %s171 = ssub.s32 %s13, 2
        // Predicated region
        $region37: #{tpu_custom_call.1} parent=35 // pred_check
          %p172 = pneg %p68
        $region38: #{tpu_custom_call.1} parent=35 // pred_check_branch
          %174 = sbr.rel (%p172) target = $region40
        $region39: #{tpu_custom_call.1} parent=35 // pred_region
          %s175 = sand.u32 %s53, 1
          %s176 = scalar_lea.sflag [#allocation4], %s175
          %s177 = sand.u32 %s53, 1
          %s178 = smul.addr %s177, 8
          %s179 = scalar_lea.vmem [#allocation5], %s178
          %180 = dma.done %s176, 128
        $region40: #{tpu_custom_call.1} parent=35 // pred_fallthru
          _
      $region36: #{tpu_custom_call.1} parent=5 // pred_fallthru
        _
    $region6: #{tpu_custom_call.1} parent=1 // loop_footer
      %s17 = sadd.s32 1, %s13
    $region7: #{tpu_custom_call.1} parent=1 // loop_footer_branch
      %12 = sbr.rel target = $region3
    $region8: #{tpu_custom_call.1} parent=1 // loop_exit
      _
    %181 = vsyncpa [#allocation3], 1
    %s182 = scalar_lea.sflag [#allocation3], 1
    %183 = vsyncpa %s182, 1
    %184 = vsyncpa [#allocation4], 1
    %s185 = scalar_lea.sflag [#allocation4], 1
    %186 = vsyncpa %s185, 1

</llo_original>
